<compile_context>
chip_gen: v7x
topology: tpu7x:2x2x1
jax: 0.10.0
libtpu: 0.0.40
codegen_flags: <defaults>
</compile_context>

<pallas_src>
import functools

import jax
import jax.numpy as jnp
from jax import lax
from jax.experimental import pallas as pl
from jax.experimental.pallas import tpu as pltpu

_LANES = 384                 # 3 channels * 128 lanes: lane-dense and triplet-aligned
assert _LANES % 3 == 0 and _LANES % 128 == 0, "_LANES must keep triplet/lane alignment"
_MAX_ROWS_PER_BLOCK = 2048   # 2048 * 384 * 4 B = 3 MiB per stream per block
_VMEM_LIMIT_BYTES = 48 * 1024 * 1024   # 3 streams x 2 bufs x 3 MiB + elementwise temps


def _regress_translation_kernel(ta_ref, d_ref, out_ref, *, scale_x=None, scale_y=None):
    ta = ta_ref[...]          # (TR, TL) flat triplets: [x, y, stride, x, y, stride, ...]
    d = d_ref[...]            # (TR, TL) flat triplets: [dx, dy, Tz, ...]
    tl = ta.shape[-1]         # static; multiple of 384 (hence of 3 and 128)

    # Bring each anchor's stride (lane 3k+2) onto its x lane (3k) and y lane
    # (3k+1).  pltpu.roll follows jnp.roll semantics: shift = tl-2 gives
    # out[j] = in[(j+2) % tl]; tl % 3 == 0 keeps the wrap inside a triplet.
    # Rolls run on the XLU slot, idle in this DMA-bound kernel.
    s_for_x = pltpu.roll(ta, shift=tl - 2, axis=1)
    s_for_y = pltpu.roll(ta, shift=tl - 1, axis=1)

    # Channel masks, hoisted to a single (1, TL) vreg row per grid step and
    # broadcast over rows by jnp.where.  Float-only j % 3 (exact for j < 2**23).
    j = lax.broadcasted_iota(jnp.int32, (1, tl), 1).astype(jnp.float32)
    ch = j - 3.0 * jnp.floor(j * (1.0 / 3.0))
    is_x = ch < 0.5           # lanes 3k   (x channel)
    is_tz = ch > 1.5          # lanes 3k+2 (Tz channel)

    stride = jnp.where(is_x, s_for_x, s_for_y)
    if scale_x is not None:
        # Lane-periodic scale [sx, sy, *] folded into ONE broadcast multiply.
        lane_scale = jnp.where(is_x, jnp.float32(scale_x),
                               jnp.float32(scale_y)).astype(ta.dtype)
        stride = stride * lane_scale

    # Channel 2 of the output is the untouched Tz straight from the deltas.
    out_ref[...] = jnp.where(is_tz, d, ta + d * stride)


def _choose_row_tile(rows: int, sublane: int) -> int:
    """Rows per block: multiple of `sublane` (or full extent), <= ~3 MiB/stream,
    and an (even) block count >= 2 when splitting so 2-TC chips stay balanced."""
    if rows <= sublane:
        return rows                                  # single full-extent block
    if rows <= 2 * _MAX_ROWS_PER_BLOCK:
        nblocks = 2
    else:
        nblocks = pl.cdiv(rows, _MAX_ROWS_PER_BLOCK)
        nblocks += nblocks % 2                       # even count for v7x megacore
    tr = -(-pl.cdiv(rows, nblocks) // sublane) * sublane
    return max(sublane, min(rows, tr))


def _run_pallas(ta2, d2, rows, scale_x, scale_y, dtype):
    itemsize = jnp.dtype(dtype).itemsize
    sublane = max(8, 8 * (4 // itemsize))            # 8 for f32, 16 for bf16
    tr = _choose_row_tile(rows, sublane)
    grid = (pl.cdiv(rows, tr),)                      # ragged last block is masked by Pallas
    spec = pl.BlockSpec((tr, _LANES), lambda i: (i, 0))

    kernel = _regress_translation_kernel
    if scale_x is not None:
        kernel = functools.partial(kernel, scale_x=scale_x, scale_y=scale_y)

    return pl.pallas_call(
        kernel,
        out_shape=jax.ShapeDtypeStruct((rows, _LANES), dtype),
        grid=grid,
        in_specs=[spec, spec],
        out_specs=spec,
        compiler_params=pltpu.CompilerParams(
            dimension_semantics=("parallel",),
            vmem_limit_bytes=_VMEM_LIMIT_BYTES),
        cost_estimate=pl.CostEstimate(
            flops=6 * rows * 128,
            transcendentals=0,
            bytes_accessed=3 * rows * _LANES * itemsize),
    )(ta2, d2)


def regress_translation(translation_anchors, regression_offsets, scale_factors=None):
    """Applies predicted 2D translation offsets to translation anchors.

    translation_anchors: (B, N, 3), last dim = (x, y, stride)
    regression_offsets : (B, N, 3), last dim = (dx, dy, Tz)
    returns            : (B, N, 3), last dim = (x + dx*stride, y + dy*stride, Tz)
    """
    B, N, C = translation_anchors.shape
    assert C == 3 and regression_offsets.shape == (B, N, 3)

    # Compute in the promoted dtype (matches the reference; supports bf16 I/O).
    out_dtype = jnp.promote_types(translation_anchors.dtype, regression_offsets.dtype)
    ta = translation_anchors.astype(out_dtype)
    d = regression_offsets.astype(out_dtype)

    if scale_factors is not None:
        scale_x = float(scale_factors[0])
        scale_y = float(scale_factors[1])
    else:
        scale_x = scale_y = None

    n_anchors = B * N
    main = (n_anchors // 128) * 128      # anchors handled by the kernel (128-aligned)
    tail = n_anchors - main              # < 128 leftover anchors: plain jnp, no pad copy

    pieces = []
    if main:
        rows = main // 128
        ta_flat = ta.reshape(-1)         # free contiguous flatten (no transpose)
        d_flat = d.reshape(-1)
        if tail:                         # aligned case stays a pure bitcast reshape
            ta_flat = ta_flat[: main * 3]
            d_flat = d_flat[: main * 3]
        out2 = _run_pallas(ta_flat.reshape(rows, _LANES),
                           d_flat.reshape(rows, _LANES),
                           rows, scale_x, scale_y, out_dtype)
        pieces.append(out2.reshape(main, 3))
    if tail:
        ta_t = ta.reshape(n_anchors, 3)[main:]
        d_t = d.reshape(n_anchors, 3)[main:]
        sxv = 1.0 if scale_x is None else scale_x
        syv = 1.0 if scale_y is None else scale_y
        stride_t = ta_t[:, 2:3]
        x = ta_t[:, 0:1] + d_t[:, 0:1] * sxv * stride_t
        y = ta_t[:, 1:2] + d_t[:, 1:2] * syv * stride_t
        pieces.append(jnp.concatenate([x, y, d_t[:, 2:3]], axis=-1))

    out = pieces[0] if len(pieces) == 1 else jnp.concatenate(pieces, axis=0)
    return out.reshape(B, N, 3)


class RegressTranslation:
    """Pallas analogue of the PyTorch RegressTranslation layer."""

    def __init__(self, name=''):
        self.name = name

    def __call__(self, inputs):
        translation_anchors, regression_offsets = inputs
        return regress_translation(translation_anchors, regression_offsets)


def _reference(ta, d, scale_factors=None):
    stride = ta[:, :, 2]
    sx = scale_factors[0] if scale_factors is not None else 1.0
    sy = scale_factors[1] if scale_factors is not None else 1.0
    x = ta[:, :, 0] + d[:, :, 0] * sx * stride
    y = ta[:, :, 1] + d[:, :, 1] * sy * stride
    return jnp.stack([x, y, d[:, :, 2]], axis=-1)


def _make_inputs(key, B, N):
    k1, k2, k3 = jax.random.split(key, 3)
    xy = jax.random.uniform(k1, (B, N, 2), jnp.float32, 0.0, 64.0)
    stride = jnp.full((B, N, 1), 8.0, jnp.float32)
    ta = jnp.concatenate([xy, stride], axis=-1)
    dxy = jax.random.normal(k2, (B, N, 2), jnp.float32)
    tz = jax.random.uniform(k3, (B, N, 1), jnp.float32, 0.1, 5.0)
    d = jnp.concatenate([dxy, tz], axis=-1)
    return ta, d


if __name__ == "__main__":
    key = jax.random.PRNGKey(0)
    layer = RegressTranslation()
    cases = [
        ((2, 256), None),        # 512 anchors: aligned, single full-extent block
        ((2, 1024), None),       # 2048 anchors: aligned, 2 even blocks (multi-block)
        ((1, 1152), None),       # rows=9: ragged last row-block (masked edge)
        ((1, 200), None),        # 128-anchor kernel prefix + 72-anchor jnp tail
        ((1, 100), None),        # < 128 anchors: pure jnp tail path
        ((2, 512), (0.5, 2.0)),  # scale_factors path (lane-periodic scale constant)
    ]
    for i, ((B, N), sf) in enumerate(cases):
        key, sub = jax.random.split(key)
        ta, d = _make_inputs(sub, B, N)
        if sf is None:
            out = layer((ta, d))
        else:
            out = regress_translation(ta, d, scale_factors=sf)
        out = jax.block_until_ready(out)
        ref = _reference(ta, d, sf)
        assert out.shape == (B, N, 3)
        assert jnp.allclose(out, ref, atol=1e-5, rtol=1e-5), f"mismatch vs reference (case {i})"
    print("KERNEL_OK")
</pallas_src>

<mosaic_0001>
module attributes {stable_mosaic.version = 11 : i64} {
  func.func @_regress_translation_kernel(%arg0: i32, %arg1: memref<4x384xf32, #tpu.memory_space<vmem>>, %arg2: memref<4x384xf32, #tpu.memory_space<vmem>>, %arg3: memref<4x384xf32, #tpu.memory_space<vmem>>) attributes {dimension_semantics = [#tpu.dimension_semantics<parallel>], iteration_bounds = array<i64: 1>, scalar_prefetch = 0 : i64, scratch_operands = 0 : i64, tpu.core_type = #tpu.core_type<tc>, window_params = [{transform_indices = @transform_0, window_bounds = array<i64: 4, 384>}, {transform_indices = @transform_1, window_bounds = array<i64: 4, 384>}, {transform_indices = @transform_2, window_bounds = array<i64: 4, 384>}]} {
    %c0 = arith.constant 0 : index
    %c0_0 = arith.constant 0 : index
    %0 = vector.load %arg1[%c0, %c0_0] : memref<4x384xf32, #tpu.memory_space<vmem>>, vector<4x384xf32>
    %c0_1 = arith.constant 0 : index
    %c0_2 = arith.constant 0 : index
    %1 = vector.load %arg2[%c0_1, %c0_2] : memref<4x384xf32, #tpu.memory_space<vmem>>, vector<4x384xf32>
    %c382_i32 = arith.constant 382 : i32
    %2 = tpu.dynamic_rotate %0 by %c382_i32 dim 1 : vector<4x384xf32>, i32 -> vector<4x384xf32>
    %c383_i32 = arith.constant 383 : i32
    %3 = tpu.dynamic_rotate %0 by %c383_i32 dim 1 : vector<4x384xf32>, i32 -> vector<4x384xf32>
    %4 = tpu.iota {dimensions = array<i32: 1>} : vector<1x384xi32>
    %5 = arith.sitofp %4 : vector<1x384xi32> to vector<1x384xf32>
    %cst = arith.constant 0.333333343 : f32
    %6 = vector.broadcast %cst : f32 to vector<1x384xf32>
    %7 = arith.mulf %5, %6 : vector<1x384xf32>
    %8 = math.floor %7 : vector<1x384xf32>
    %cst_3 = arith.constant 3.000000e+00 : f32
    %9 = vector.broadcast %cst_3 : f32 to vector<1x384xf32>
    %10 = arith.mulf %9, %8 : vector<1x384xf32>
    %11 = arith.subf %5, %10 : vector<1x384xf32>
    %cst_4 = arith.constant 5.000000e-01 : f32
    %12 = vector.broadcast %cst_4 : f32 to vector<1x384xf32>
    %13 = arith.cmpf olt, %11, %12 : vector<1x384xf32>
    %cst_5 = arith.constant 1.500000e+00 : f32
    %14 = vector.broadcast %cst_5 : f32 to vector<1x384xf32>
    %15 = arith.cmpf ogt, %11, %14 : vector<1x384xf32>
    %16 = vector.shape_cast %13 : vector<1x384xi1> to vector<1x384xi1>
    %17 = vector.broadcast %16 : vector<1x384xi1> to vector<4x384xi1>
    %18 = arith.select %17, %2, %3 : vector<4x384xi1>, vector<4x384xf32>
    %19 = arith.mulf %1, %18 : vector<4x384xf32>
    %20 = arith.addf %0, %19 : vector<4x384xf32>
    %21 = vector.shape_cast %15 : vector<1x384xi1> to vector<1x384xi1>
    %22 = vector.broadcast %21 : vector<1x384xi1> to vector<4x384xi1>
    %23 = arith.select %22, %1, %20 : vector<4x384xi1>, vector<4x384xf32>
    %c0_6 = arith.constant 0 : index
    %c0_7 = arith.constant 0 : index
    %24 = vector.load %arg3[%c0_6, %c0_7] : memref<4x384xf32, #tpu.memory_space<vmem>>, vector<4x384xf32>
    tpu.vector_store %arg3[%c0_6, %c0_7], %23 {strides = array<i32>} : memref<4x384xf32, #tpu.memory_space<vmem>>, vector<4x384xf32>,
    return
  }
  func.func @transform_0(%arg0: i32) -> (i32, i32) {
    %c0_i32 = arith.constant 0 : i32
    %c0_i32_0 = arith.constant 0 : i32
    return %arg0, %c0_i32 : i32, i32
  }
  func.func @transform_1(%arg0: i32) -> (i32, i32) {
    %c0_i32 = arith.constant 0 : i32
    %c0_i32_0 = arith.constant 0 : i32
    return %arg0, %c0_i32 : i32, i32
  }
  func.func @transform_2(%arg0: i32) -> (i32, i32) {
    %c0_i32 = arith.constant 0 : i32
    %c0_i32_0 = arith.constant 0 : i32
    return %arg0, %c0_i32 : i32, i32
  }
}

</mosaic_0001>

<llo_original>
// kernel: tpu_custom_call.1
$region0: #{tpu_custom_call.1}
  #allocation0 [shape = 'u32[]', space=smem, size = 0x4, offset = 0x4, fixed_abs, tag = 'smem constant byte address 0x4 - core index']
  #allocation1 [shape = 'u32[144,128]{1,0:T(1,128)}', space=vmem, size = 0x12000, scoped, tag = 'internal scratch']
  %s0 = inlined_call_operand.hbm [shape: f32[4,384], index: 0, kind: input, shape index: {}]
  %s1 = inlined_call_operand.hbm [shape: f32[4,384], index: 1, kind: input, shape index: {}]
  %s2 = inlined_call_operand.hbm [shape: f32[4,384], index: 2, kind: output, shape index: {}]
  %s3 = sld [smem:[#allocation0]]
  $region26: #{tpu_custom_call.1} parent=0
    _
  %s5 = ssub.s32 1, %s3
  %s6 = scalar_select 0, %s5, %s3
  $region1: #{tpu_custom_call.1} parent=0
    #allocation2 [shape = 'u8[6144]{0}', space=vmem, size = 0x1800, scoped, tag = 'input window, operand 0, single buffered']
    #allocation3 [shape = 's32[1]{0}', space=sflag, size = 0x4, scoped, tag = 'scoped memory for tpu_custom_call.1']
    #allocation4 [shape = 's32[1]{0}', space=sflag, size = 0x4, scoped, tag = 'scoped memory for tpu_custom_call.1']
    #allocation5 [shape = 'u8[6144]{0}', space=vmem, size = 0x1800, scoped, tag = 'input window, operand 1, single buffered']
    #allocation6 [shape = 's32[1]{0}', space=sflag, size = 0x4, scoped, tag = 'scoped memory for tpu_custom_call.1']
    #allocation7 [shape = 'u8[6144]{0}', space=vmem, size = 0x1800, scoped, tag = 'output window, operand 0, single buffered']
    %7 = vsyncpa [#allocation3], 0
    %8 = vsyncpa [#allocation6], 0
    %9 = vsyncpa [#allocation4], 0
    // Predicated region
    $region2: #{tpu_custom_call.1} parent=1 // pred_check
      _
    $region3: #{tpu_custom_call.1} parent=1 // pred_check_branch
      %11 = sbr.rel (0) target = $region5
    $region4: #{tpu_custom_call.1} parent=1 // pred_region
      %s13 = ssub.s32 192, 192
      %14 = vsyncadd [#allocation3], %s13
      %s16 = sshll.u32 [#allocation2], 4
      %s17 = int_to_ptr.vmem [resolvable:$true] %s16
      %19 = dma.hbm_to_vmem [thread:$0]  %s0, 192, %s17, [#allocation3]
    $region5: #{tpu_custom_call.1} parent=1 // pred_fallthru
      _
    // Predicated region
    $region6: #{tpu_custom_call.1} parent=1 // pred_check
      _
    $region7: #{tpu_custom_call.1} parent=1 // pred_check_branch
      %21 = sbr.rel (0) target = $region9
    $region8: #{tpu_custom_call.1} parent=1 // pred_region
      %s23 = ssub.s32 192, 192
      %24 = vsyncadd [#allocation6], %s23
      %s26 = sshll.u32 [#allocation5], 4
      %s27 = int_to_ptr.vmem [resolvable:$true] %s26
      %29 = dma.hbm_to_vmem [thread:$0]  %s1, 192, %s27, [#allocation6]
    $region9: #{tpu_custom_call.1} parent=1 // pred_fallthru
      _
    // Predicated region
    $region10: #{tpu_custom_call.1} parent=1 // pred_check
      _
    $region11: #{tpu_custom_call.1} parent=1 // pred_check_branch
      %31 = sbr.rel (0) target = $region13
    $region12: #{tpu_custom_call.1} parent=1 // pred_region
      %32 = dma.done [#allocation3], 192
    $region13: #{tpu_custom_call.1} parent=1 // pred_fallthru
      _
    // Predicated region
    $region14: #{tpu_custom_call.1} parent=1 // pred_check
      _
    $region15: #{tpu_custom_call.1} parent=1 // pred_check_branch
      %34 = sbr.rel (0) target = $region17
    $region16: #{tpu_custom_call.1} parent=1 // pred_region
      %35 = dma.done [#allocation6], 192
    $region17: #{tpu_custom_call.1} parent=1 // pred_fallthru
      _
    %v36 = vld [vmem:[#allocation2] sm:$0xff]
    %v37 = vld [vmem:[#allocation2 + $0x8] sm:$0xf]
    %v38 = vld [vmem:[#allocation5] sm:$0xff]
    %v39 = vld [vmem:[#allocation5 + $0x8] sm:$0xf]
    %v41 = vcombine.high %v36, %v36
    %43 = vrot.lane.b32.xlu0 %v36, 126
    %v44 = vpop.permute.xlu0 %43
    %45 = vrot.lane.b32.xlu0 %v41, 126
    %v46 = vpop.permute.xlu0 %45
    %47 = vrot.lane.b32.xlu0 %v37, 126
    %v48 = vpop.permute.xlu0 %47
    %v49 = vlaneseq
    %v50 = vand.u32 %v49, 127
    %vm51 = vcmp.lt.s32.totalorder %v50, 126
    %v52 = vsel %vm51, %v46, %v48
    %v53 = vsel %vm51, %v44, %v46
    %v54 = vsel %vm51, %v48, %v44
    %55 = vrot.lane.b32.xlu0 %v36, 127
    %v56 = vpop.permute.xlu0 %55
    %57 = vrot.lane.b32.xlu0 %v41, 127
    %v58 = vpop.permute.xlu0 %57
    %59 = vrot.lane.b32.xlu0 %v37, 127
    %v60 = vpop.permute.xlu0 %59
    %vm61 = vcmp.lt.s32.totalorder %v50, 127
    %v62 = vsel %vm61, %v58, %v60
    %v63 = vsel %vm61, %v56, %v58
    %v64 = vsel %vm61, %v60, %v56
    %v65 = vadd.s32 %v50, 128
    %v66 = vadd.s32 %v50, 256
    %v67 = vcvt.s32.f32 %v50
    %v68 = vcvt.s32.f32 %v65
    %v69 = vcvt.s32.f32 %v66
    %v70 = vmul.f32 %v67, 0.33333334
    %v71 = vmul.f32 %v68, 0.33333334
    %v72 = vmul.f32 %v69, 0.33333334
    %v73 = vfloor.f32 %v70
    %v74 = vfloor.f32 %v71
    %v75 = vfloor.f32 %v72
    %v76 = vmul.f32 %v73, 3.0
    %v77 = vmul.f32 %v74, 3.0
    %v78 = vmul.f32 %v75, 3.0
    %v79 = vsub.f32 %v67, %v76
    %v80 = vsub.f32 %v68, %v77
    %v81 = vsub.f32 %v69, %v78
    %vm82 = vcmp.lt.f32.partialorder %v79, 0.5
    %vm83 = vcmp.lt.f32.partialorder %v80, 0.5
    %vm84 = vcmp.lt.f32.partialorder %v81, 0.5
    %vm85 = vcmp.gt.f32.partialorder %v79, 1.5
    %vm86 = vcmp.gt.f32.partialorder %v80, 1.5
    %vm87 = vcmp.gt.f32.partialorder %v81, 1.5
    %v88 = vsel %vm82, 1, 0
    %v89 = vsel %vm83, 1, 0
    %v90 = vsel %vm84, 1, 0
    %vm91 = vcmp.eq.s32.totalorder %v88, 1
    %vm92 = vcmp.eq.s32.totalorder %v89, 1
    %vm93 = vcmp.eq.s32.totalorder %v90, 1
    %v94 = vsel %vm91, %v53, %v63
    %v95 = vsel %vm92, %v52, %v62
    %v96 = vsel %vm93, %v54, %v64
    %v99 = vcombine.low %v94, %v95
    %v101 = vmul.f32 %v38, %v99
    %v102 = vmul.f32 %v39, %v96
    %v103 = vadd.f32 %v36, %v101
    %v104 = vadd.f32 %v37, %v102
    %v105 = vsel %vm85, 1, 0
    %v106 = vsel %vm86, 1, 0
    %v107 = vsel %vm87, 1, 0
    %vm108 = vcmp.eq.s32.totalorder %v105, 1
    %vm109 = vcmp.eq.s32.totalorder %v106, 1
    %vm110 = vcmp.eq.s32.totalorder %v107, 1
    %v112 = vcombine.high %v38, %v38
    %v115 = vcombine.high %v103, %v103
    %v117 = vsel %vm108, %v38, %v103
    %v118 = vsel %vm109, %v112, %v115
    %v119 = vsel %vm110, %v39, %v104
    %v122 = vcombine.low %v117, %v118
    %124 = vst [vmem:[#allocation7] sm:$0xff] %v122
    %125 = vst [vmem:[#allocation7 + $0x8] sm:$0xf] %v119
    // Predicated region
    $region18: #{tpu_custom_call.1} parent=1 // pred_check
      _
    $region19: #{tpu_custom_call.1} parent=1 // pred_check_branch
      %127 = sbr.rel (0) target = $region21
    $region20: #{tpu_custom_call.1} parent=1 // pred_region
      %s129 = ssub.s32 192, 192
      %130 = vsyncadd [#allocation4], %s129
      %s132 = sshll.u32 [#allocation7], 4
      %s133 = int_to_ptr.vmem [resolvable:$true] %s132
      %135 = dma.vmem_to_hbm [thread:$0]  %s133, 192, %s2, [#allocation4]
    $region21: #{tpu_custom_call.1} parent=1 // pred_fallthru
      _
    // Predicated region
    $region22: #{tpu_custom_call.1} parent=1 // pred_check
      _
    $region23: #{tpu_custom_call.1} parent=1 // pred_check_branch
      %137 = sbr.rel (0) target = $region25
    $region24: #{tpu_custom_call.1} parent=1 // pred_region
      %138 = dma.done [#allocation4], 192
    $region25: #{tpu_custom_call.1} parent=1 // pred_fallthru
      _
    %139 = vsyncpa [#allocation3], 1
    %140 = vsyncpa [#allocation6], 1
    %141 = vsyncpa [#allocation4], 1

</llo_original>
